<compile_context>
chip_gen: v6e
topology: v6e:2x2x1
jax: 0.10.0
libtpu: 0.0.40
codegen_flags: <defaults>
</compile_context>

<pallas_src>
import jax
import jax.numpy as jnp
from jax.experimental import pallas as pl
from jax.experimental.pallas import tpu as pltpu


def _hsigmoid_kernel(x_ref, o_ref):
    x = x_ref[...]
    if x.dtype not in (jnp.float32, jnp.bfloat16):
        x = x.astype(jnp.float32)
    y = jnp.clip((x + 3.0) * (1.0 / 6.0), 0.0, 1.0)
    o_ref[...] = y.astype(o_ref.dtype)


def _hsigmoid_xla(x):
    # Fused-XLA fallback for tiny / non-lane-dense shapes (one HBM pass).
    return jnp.clip(x + 3.0, 0.0, 6.0) / 6.0


_TARGET_TILE_BYTES = 2 * 1024 * 1024   # ~2 MiB/tile -> ~8 MiB live (in+out, 2x buffered)
_MIN_SPLIT_BYTES = 512 * 1024          # force >=2 grid steps above this (v7x megacore)
_MIN_PALLAS_BYTES = 256 * 1024         # below this XLA fused elementwise wins
_MAX_WIDTH = 8192                      # largest lane-dense width to search for


def hsigmoid(x: jax.Array, *, donate_input: bool = False) -> jax.Array:
    """Pallas implementation of Hsigmoid.forward(x) = relu6(x + 3) / 6."""
    total = x.size
    itemsize = jnp.dtype(x.dtype).itemsize
    total_bytes = total * itemsize

    # Tiny tensors, or element counts that don't factor into a lane-dense slab:
    # custom-call + per-grid-step overhead dominates, and padding would add
    # extra HBM passes, so use a single fused XLA pass instead.
    if total == 0 or total % 128 != 0 or total_bytes < _MIN_PALLAS_BYTES:
        return _hsigmoid_xla(x)

    # Largest lane-dense width (multiple of 128) that divides the element count.
    width = 128
    for w in range(_MAX_WIDTH, 127, -128):
        if total % w == 0:
            width = w
            break
    rows = total // width
    x2 = x.reshape(rows, width)           # contiguous reshape: metadata only

    # dtype-native sublane multiple: 8 (f32), 16 (bf16/f16), 32 (int8/fp8).
    sub = max(8, 32 // itemsize)
    row_bytes = width * itemsize

    block_rows = max(sub, (_TARGET_TILE_BYTES // row_bytes) // sub * sub)
    block_rows = min(block_rows, rows)
    # Guarantee >= 2 grid steps so the "parallel" axis can shard across v7x's
    # two TensorCores once the slab is big enough to amortize the extra step.
    if block_rows == rows and rows >= 2 * sub and total_bytes >= _MIN_SPLIT_BYTES:
        half = ((rows + 1) // 2 + sub - 1) // sub * sub
        block_rows = min(rows, half)

    grid = (pl.cdiv(rows, block_rows),)
    block_bytes = block_rows * width * itemsize
    # Explicit VMEM budget: double-buffered (in + out) blocks + scratch headroom.
    vmem_limit = int(4 * block_bytes + (2 << 20))

    out2 = pl.pallas_call(
        _hsigmoid_kernel,
        out_shape=jax.ShapeDtypeStruct((rows, width), x.dtype),
        grid=grid,
        in_specs=[pl.BlockSpec((block_rows, width), lambda i: (i, 0))],
        out_specs=pl.BlockSpec((block_rows, width), lambda i: (i, 0)),
        compiler_params=pltpu.CompilerParams(
            dimension_semantics=("parallel",),
            vmem_limit_bytes=vmem_limit,
        ),
        cost_estimate=pl.CostEstimate(
            flops=4 * total,
            transcendentals=0,
            bytes_accessed=2 * total_bytes,
        ),
        input_output_aliases=({0: 0} if donate_input else {}),
    )(x2)

    return out2.reshape(x.shape)


if __name__ == "__main__":
    key = jax.random.PRNGKey(0)
    k1, k2, k3 = jax.random.split(key, 3)

    # Small NCHW input consistent with the module (batch=2, channels=4, 16x16);
    # scaled so both saturation regions of hardsigmoid are exercised.
    x_small = jax.random.normal(k1, (2, 4, 16, 16), dtype=jnp.float32) * 4.0
    # Moderately sized activation map -> exercises the Pallas path (2-step grid).
    x_large = jax.random.normal(k2, (2, 32, 64, 64), dtype=jnp.float32) * 4.0
    # Odd shape (not a multiple of 128) -> lane-dense fallback path.
    x_odd = jax.random.normal(k3, (3, 5, 7, 11), dtype=jnp.float32) * 4.0

    for x in (x_small, x_large, x_odd):
        y = hsigmoid(x)
        jax.block_until_ready(y)
        ref = jnp.clip(x + 3.0, 0.0, 6.0) / 6.0
        assert y.shape == x.shape
        assert y.dtype == x.dtype
        assert bool(jnp.allclose(y, ref, rtol=1e-6, atol=1e-6))

    print("KERNEL_OK")
</pallas_src>

<mosaic_0001>
module attributes {stable_mosaic.version = 11 : i64} {
  func.func @_hsigmoid_kernel(%arg0: i32, %arg1: memref<16x8192xf32, #tpu.memory_space<vmem>>, %arg2: memref<16x8192xf32, #tpu.memory_space<vmem>>) attributes {dimension_semantics = [#tpu.dimension_semantics<parallel>], iteration_bounds = array<i64: 2>, scalar_prefetch = 0 : i64, scratch_operands = 0 : i64, tpu.core_type = #tpu.core_type<tc>, window_params = [{transform_indices = @transform_0, window_bounds = array<i64: 16, 8192>}, {transform_indices = @transform_1, window_bounds = array<i64: 16, 8192>}]} {
    %c0 = arith.constant 0 : index
    %c0_0 = arith.constant 0 : index
    %0 = vector.load %arg1[%c0, %c0_0] : memref<16x8192xf32, #tpu.memory_space<vmem>>, vector<16x8192xf32>
    %cst = arith.constant 3.000000e+00 : f32
    %1 = vector.broadcast %cst : f32 to vector<16x8192xf32>
    %2 = arith.addf %0, %1 : vector<16x8192xf32>
    %cst_1 = arith.constant 0.166666672 : f32
    %3 = vector.broadcast %cst_1 : f32 to vector<16x8192xf32>
    %4 = arith.mulf %2, %3 : vector<16x8192xf32>
    %cst_2 = arith.constant 0.000000e+00 : f32
    %cst_3 = arith.constant 1.000000e+00 : f32
    %5 = vector.broadcast %cst_2 : f32 to vector<16x8192xf32>
    %6 = arith.maximumf %5, %4 : vector<16x8192xf32>
    %7 = vector.broadcast %cst_3 : f32 to vector<16x8192xf32>
    %8 = arith.minimumf %7, %6 : vector<16x8192xf32>
    %c0_4 = arith.constant 0 : index
    %c0_5 = arith.constant 0 : index
    %9 = vector.load %arg2[%c0_4, %c0_5] : memref<16x8192xf32, #tpu.memory_space<vmem>>, vector<16x8192xf32>
    tpu.vector_store %arg2[%c0_4, %c0_5], %8 {strides = array<i32>} : memref<16x8192xf32, #tpu.memory_space<vmem>>, vector<16x8192xf32>,
    return
  }
  func.func @transform_0(%arg0: i32) -> (i32, i32) {
    %c0_i32 = arith.constant 0 : i32
    %c0_i32_0 = arith.constant 0 : i32
    return %arg0, %c0_i32 : i32, i32
  }
  func.func @transform_1(%arg0: i32) -> (i32, i32) {
    %c0_i32 = arith.constant 0 : i32
    %c0_i32_0 = arith.constant 0 : i32
    return %arg0, %c0_i32 : i32, i32
  }
}

</mosaic_0001>

<llo_original>
// kernel: tpu_custom_call.1
$region0: #{tpu_custom_call.1}
  #allocation0 [shape = 'u32[]', space=smem, size = 0x4, offset = 0x4, fixed_abs, tag = 'smem constant byte address 0x4 - core index']
  #allocation1 [shape = 'u32[144,128]{1,0:T(1,128)}', space=vmem, size = 0x12000, scoped, tag = 'internal scratch']
  %s0 = inlined_call_operand.hbm [shape: f32[32,8192], index: 0, kind: input, shape index: {}]
  %s1 = inlined_call_operand.hbm [shape: f32[32,8192], index: 1, kind: output, shape index: {}]
  %s2 = sld [smem:[#allocation0]]
  $region41: #{tpu_custom_call.1} parent=0
    _
  %s4 = ssub.s32 1, %s2
  %s5 = scalar_select 0, %s4, %s2
  $region1: #{tpu_custom_call.1} parent=0
    #allocation2 [shape = 'u8[1048576]{0}', space=vmem, size = 0x100000, scoped, tag = 'input window, operand 0']
    #allocation3 [shape = 's32[2]{0}', space=sflag, size = 0x8, scoped, tag = 'scoped memory for tpu_custom_call.1']
    #allocation4 [shape = 's32[2]{0}', space=sflag, size = 0x8, scoped, tag = 'scoped memory for tpu_custom_call.1']
    #allocation5 [shape = 'u8[1048576]{0}', space=vmem, size = 0x100000, scoped, tag = 'output window, operand 0']
    %6 = vsyncpa [#allocation3], 0
    %s7 = scalar_lea.sflag [#allocation3], 1
    %8 = vsyncpa %s7, 0
    %9 = vsyncpa [#allocation4], 0
    %s10 = scalar_lea.sflag [#allocation4], 1
    %11 = vsyncpa %s10, 0
    loop: start=0, step=1, limit=4
    $region2: #{tpu_custom_call.1} parent=1 // loop_pre_header
      _
    $region3: #{tpu_custom_call.1} parent=1 // loop_header
      %s13 = sphi 0, %s17
      %p14 = scmp.ge.s32.totalorder %s13, 4
      %s23 = sphi 0, %s25
      %s26 = sphi 0, %s23
      %s27 = sphi 0, %s26
      %s43 = sphi 0, %s27
      %s49 = sphi 0, %s51
      %s52 = sphi 0, %s49
      %s53 = sphi 0, %s52
      %s69 = sphi 0, %s53
    $region4: #{tpu_custom_call.1} parent=1 // loop_header_branch
      %16 = sbr.rel (%p14) target = $region8
    $region5: #{tpu_custom_call.1} parent=1 // loop_body
      %s18 = ssub.s32 %s13, 1
      %s19 = ssub.s32 %s13, 2
      %s20 = sadd.s32 %s13, 1
      %s21 = ssub.s32 %s13, %s20
      %p22 = scmp.eq.s32.totalorder %s21, 0
      %s24 = sadd.s32 %s23, 1
      %s25 = scalar_select %p22, %s23, %s24
      %p28 = pneg %p22
      %p29 = scmp.eq.s32.totalorder %s13, 1
      %p30 = por %p28, %p29
      %p31 = scmp.ne.s32.totalorder %s23, %s26
      %p32 = scmp.eq.s32.totalorder %s13, 0
      %p33 = por %p31, %p32
      %p34 = scmp.ne.s32.totalorder %s23, %s26
      %p35 = scmp.eq.s32.totalorder %s18, 1
      %p36 = por %p34, %p35
      %p37 = scmp.ne.s32.totalorder %s26, %s27
      %p38 = scmp.eq.s32.totalorder %s18, 0
      %p39 = por %p37, %p38
      %p40 = scmp.ne.s32.totalorder %s26, %s27
      %p41 = scmp.eq.s32.totalorder %s19, 1
      %p42 = por %p40, %p41
      %p44 = scmp.ne.s32.totalorder %s27, %s43
      %p45 = scmp.eq.s32.totalorder %s19, 0
      %p46 = por %p44, %p45
      %s47 = ssub.s32 %s13, %s20
      %p48 = scmp.eq.s32.totalorder %s47, 0
      %s50 = sadd.s32 %s49, 1
      %s51 = scalar_select %p48, %s49, %s50
      %p54 = pneg %p48
      %p55 = scmp.eq.s32.totalorder %s13, 1
      %p56 = por %p54, %p55
      %p57 = scmp.ne.s32.totalorder %s49, %s52
      %p58 = scmp.eq.s32.totalorder %s13, 0
      %p59 = por %p57, %p58
      %p60 = scmp.ne.s32.totalorder %s49, %s52
      %p61 = scmp.eq.s32.totalorder %s18, 1
      %p62 = por %p60, %p61
      %p63 = scmp.ne.s32.totalorder %s52, %s53
      %p64 = scmp.eq.s32.totalorder %s18, 0
      %p65 = por %p63, %p64
      %p66 = scmp.ne.s32.totalorder %s52, %s53
      %p67 = scmp.eq.s32.totalorder %s19, 1
      %p68 = por %p66, %p67
      %p70 = scmp.ne.s32.totalorder %s53, %s69
      %p71 = scmp.eq.s32.totalorder %s19, 0
      %p72 = por %p70, %p71
      %p73 = scmp.le.s32.totalorder 1, %s13
      %p74 = scmp.lt.s32.totalorder %s13, 3
      %p75 = pnand %p73, %p74
      %p76 = pneg %p75
      // Predicated region
      $region9: #{tpu_custom_call.1} parent=5 // pred_check
        _
      $region10: #{tpu_custom_call.1} parent=5 // pred_check_branch
        %78 = sbr.rel (%p75) target = $region12
      $region11: #{tpu_custom_call.1} parent=5 // pred_region
        %s79 = ssub.s32 %s13, 1
      $region12: #{tpu_custom_call.1} parent=5 // pred_fallthru
        _
      %p80 = scmp.lt.s32.totalorder %s13, 2
      // Predicated region
      $region13: #{tpu_custom_call.1} parent=5 // pred_check
        %p81 = pneg %p80
      $region14: #{tpu_custom_call.1} parent=5 // pred_check_branch
        %83 = sbr.rel (%p81) target = $region16
      $region15: #{tpu_custom_call.1} parent=5 // pred_region
        // Predicated region
        $region17: #{tpu_custom_call.1} parent=15 // pred_check
          %p84 = pneg %p33
        $region18: #{tpu_custom_call.1} parent=15 // pred_check_branch
          %86 = sbr.rel (%p84) target = $region20
        $region19: #{tpu_custom_call.1} parent=15 // pred_region
          %s87 = sand.u32 %s23, 1
          %s88 = scalar_lea.sflag [#allocation3], %s87
          %s89 = sand.u32 %s23, 1
          %s90 = smul.addr %s89, 1024
          %s91 = scalar_lea.vmem [#allocation2], %s90
          %s92 = smul.u32 2, %s13
          %s94 = ssub.s32 16384, 16384
          %95 = vsyncadd %s88, %s94
          %s96 = smul.addr %s92, 64
          %s97 = smul.addr %s96, 128
          %s98 = scalar_lea.hbm %s0, %s97
          %s99 = sshll.u32 %s91, 4
          %s100 = int_to_ptr.vmem [resolvable:$true] %s99
          %105 = dma.hbm_to_vmem [thread:$0]  %s98, 16384, %s100, %s88, 8192, 8192, 512
        $region20: #{tpu_custom_call.1} parent=15 // pred_fallthru
          _
      $region16: #{tpu_custom_call.1} parent=5 // pred_fallthru
        _
      %p106 = scmp.le.s32.totalorder 1, %s13
      %p107 = scmp.lt.s32.totalorder %s13, 3
      %p108 = pnand %p106, %p107
      %p109 = pneg %p108
      // Predicated region
      $region21: #{tpu_custom_call.1} parent=5 // pred_check
        _
      $region22: #{tpu_custom_call.1} parent=5 // pred_check_branch
        %111 = sbr.rel (%p108) target = $region24
      $region23: #{tpu_custom_call.1} parent=5 // pred_region
        %s112 = ssub.s32 %s13, 1
        %s113 = sand.u32 %s26, 1
        %s114 = scalar_lea.sflag [#allocation3], %s113
        %s115 = sand.u32 %s26, 1
        %s116 = smul.addr %s115, 1024
        %s117 = scalar_lea.vmem [#allocation2], %s116
        // Predicated region
        $region25: #{tpu_custom_call.1} parent=23 // pred_check
          %p118 = pneg %p39
        $region26: #{tpu_custom_call.1} parent=23 // pred_check_branch
          %120 = sbr.rel (%p118) target = $region28
        $region27: #{tpu_custom_call.1} parent=23 // pred_region
          %121 = dma.done %s114, 16384
        $region28: #{tpu_custom_call.1} parent=23 // pred_fallthru
          _
        %s122 = sand.u32 %s26, 1
        %s123 = scalar_lea.sflag [#allocation3], %s122
        %s124 = sand.u32 %s26, 1
        %s125 = smul.addr %s124, 1024
        %s126 = scalar_lea.vmem [#allocation2], %s125
        %p127 = pneg %p39
        %p128 = pneg %p36
        %p129 = pneg %p65
        %p130 = pneg %p62
        %s131 = sand.u32 %s52, 1
        %s132 = scalar_lea.sflag [#allocation4], %s131
        %s133 = sand.u32 %s52, 1
        %s134 = smul.addr %s133, 1024
        %s135 = scalar_lea.vmem [#allocation5], %s134
        %s136 = smul.u32 2, %s18
        %s137 = smul.u32 2, %s18
        %v138 = vld [vmem:[%s117] sm:$0xff]
        %v139 = vld [vmem:[%s117 + $0x8] sm:$0xff]
        %v140 = vld [vmem:[%s117 + $0x10] sm:$0xff]
        %v141 = vld [vmem:[%s117 + $0x18] sm:$0xff]
        %v142 = vld [vmem:[%s117 + $0x20] sm:$0xff]
        %v143 = vld [vmem:[%s117 + $0x28] sm:$0xff]
        %v144 = vld [vmem:[%s117 + $0x30] sm:$0xff]
        %v145 = vld [vmem:[%s117 + $0x38] sm:$0xff]
        %v146 = vld [vmem:[%s117 + $0x40] sm:$0xff]
        %v147 = vld [vmem:[%s117 + $0x48] sm:$0xff]
        %v148 = vld [vmem:[%s117 + $0x50] sm:$0xff]
        %v149 = vld [vmem:[%s117 + $0x58] sm:$0xff]
        %v150 = vld [vmem:[%s117 + $0x60] sm:$0xff]
        %v151 = vld [vmem:[%s117 + $0x68] sm:$0xff]
        %v152 = vld [vmem:[%s117 + $0x70] sm:$0xff]
        %v153 = vld [vmem:[%s117 + $0x78] sm:$0xff]
        %v154 = vld [vmem:[%s117 + $0x80] sm:$0xff]
        %v155 = vld [vmem:[%s117 + $0x88] sm:$0xff]
        %v156 = vld [vmem:[%s117 + $0x90] sm:$0xff]
        %v157 = vld [vmem:[%s117 + $0x98] sm:$0xff]
        %v158 = vld [vmem:[%s117 + $0xa0] sm:$0xff]
        %v159 = vld [vmem:[%s117 + $0xa8] sm:$0xff]
        %v160 = vld [vmem:[%s117 + $0xb0] sm:$0xff]
        %v161 = vld [vmem:[%s117 + $0xb8] sm:$0xff]
        %v162 = vld [vmem:[%s117 + $0xc0] sm:$0xff]
        %v163 = vld [vmem:[%s117 + $0xc8] sm:$0xff]
        %v164 = vld [vmem:[%s117 + $0xd0] sm:$0xff]
        %v165 = vld [vmem:[%s117 + $0xd8] sm:$0xff]
        %v166 = vld [vmem:[%s117 + $0xe0] sm:$0xff]
        %v167 = vld [vmem:[%s117 + $0xe8] sm:$0xff]
        %v168 = vld [vmem:[%s117 + $0xf0] sm:$0xff]
        %v169 = vld [vmem:[%s117 + $0xf8] sm:$0xff]
        %v170 = vld [vmem:[%s117 + $0x100] sm:$0xff]
        %v171 = vld [vmem:[%s117 + $0x108] sm:$0xff]
        %v172 = vld [vmem:[%s117 + $0x110] sm:$0xff]
        %v173 = vld [vmem:[%s117 + $0x118] sm:$0xff]
        %v174 = vld [vmem:[%s117 + $0x120] sm:$0xff]
        %v175 = vld [vmem:[%s117 + $0x128] sm:$0xff]
        %v176 = vld [vmem:[%s117 + $0x130] sm:$0xff]
        %v177 = vld [vmem:[%s117 + $0x138] sm:$0xff]
        %v178 = vld [vmem:[%s117 + $0x140] sm:$0xff]
        %v179 = vld [vmem:[%s117 + $0x148] sm:$0xff]
        %v180 = vld [vmem:[%s117 + $0x150] sm:$0xff]
        %v181 = vld [vmem:[%s117 + $0x158] sm:$0xff]
        %v182 = vld [vmem:[%s117 + $0x160] sm:$0xff]
        %v183 = vld [vmem:[%s117 + $0x168] sm:$0xff]
        %v184 = vld [vmem:[%s117 + $0x170] sm:$0xff]
        %v185 = vld [vmem:[%s117 + $0x178] sm:$0xff]
        %v186 = vld [vmem:[%s117 + $0x180] sm:$0xff]
        %v187 = vld [vmem:[%s117 + $0x188] sm:$0xff]
        %v188 = vld [vmem:[%s117 + $0x190] sm:$0xff]
        %v189 = vld [vmem:[%s117 + $0x198] sm:$0xff]
        %v190 = vld [vmem:[%s117 + $0x1a0] sm:$0xff]
        %v191 = vld [vmem:[%s117 + $0x1a8] sm:$0xff]
        %v192 = vld [vmem:[%s117 + $0x1b0] sm:$0xff]
        %v193 = vld [vmem:[%s117 + $0x1b8] sm:$0xff]
        %v194 = vld [vmem:[%s117 + $0x1c0] sm:$0xff]
        %v195 = vld [vmem:[%s117 + $0x1c8] sm:$0xff]
        %v196 = vld [vmem:[%s117 + $0x1d0] sm:$0xff]
        %v197 = vld [vmem:[%s117 + $0x1d8] sm:$0xff]
        %v198 = vld [vmem:[%s117 + $0x1e0] sm:$0xff]
        %v199 = vld [vmem:[%s117 + $0x1e8] sm:$0xff]
        %v200 = vld [vmem:[%s117 + $0x1f0] sm:$0xff]
        %v201 = vld [vmem:[%s117 + $0x1f8] sm:$0xff]
        %v202 = vld [vmem:[%s117 + $0x200] sm:$0xff]
        %v203 = vld [vmem:[%s117 + $0x208] sm:$0xff]
        %v204 = vld [vmem:[%s117 + $0x210] sm:$0xff]
        %v205 = vld [vmem:[%s117 + $0x218] sm:$0xff]
        %v206 = vld [vmem:[%s117 + $0x220] sm:$0xff]
        %v207 = vld [vmem:[%s117 + $0x228] sm:$0xff]
        %v208 = vld [vmem:[%s117 + $0x230] sm:$0xff]
        %v209 = vld [vmem:[%s117 + $0x238] sm:$0xff]
        %v210 = vld [vmem:[%s117 + $0x240] sm:$0xff]
        %v211 = vld [vmem:[%s117 + $0x248] sm:$0xff]
        %v212 = vld [vmem:[%s117 + $0x250] sm:$0xff]
        %v213 = vld [vmem:[%s117 + $0x258] sm:$0xff]
        %v214 = vld [vmem:[%s117 + $0x260] sm:$0xff]
        %v215 = vld [vmem:[%s117 + $0x268] sm:$0xff]
        %v216 = vld [vmem:[%s117 + $0x270] sm:$0xff]
        %v217 = vld [vmem:[%s117 + $0x278] sm:$0xff]
        %v218 = vld [vmem:[%s117 + $0x280] sm:$0xff]
        %v219 = vld [vmem:[%s117 + $0x288] sm:$0xff]
        %v220 = vld [vmem:[%s117 + $0x290] sm:$0xff]
        %v221 = vld [vmem:[%s117 + $0x298] sm:$0xff]
        %v222 = vld [vmem:[%s117 + $0x2a0] sm:$0xff]
        %v223 = vld [vmem:[%s117 + $0x2a8] sm:$0xff]
        %v224 = vld [vmem:[%s117 + $0x2b0] sm:$0xff]
        %v225 = vld [vmem:[%s117 + $0x2b8] sm:$0xff]
        %v226 = vld [vmem:[%s117 + $0x2c0] sm:$0xff]
        %v227 = vld [vmem:[%s117 + $0x2c8] sm:$0xff]
        %v228 = vld [vmem:[%s117 + $0x2d0] sm:$0xff]
        %v229 = vld [vmem:[%s117 + $0x2d8] sm:$0xff]
        %v230 = vld [vmem:[%s117 + $0x2e0] sm:$0xff]
        %v231 = vld [vmem:[%s117 + $0x2e8] sm:$0xff]
        %v232 = vld [vmem:[%s117 + $0x2f0] sm:$0xff]
        %v233 = vld [vmem:[%s117 + $0x2f8] sm:$0xff]
        %v234 = vld [vmem:[%s117 + $0x300] sm:$0xff]
        %v235 = vld [vmem:[%s117 + $0x308] sm:$0xff]
        %v236 = vld [vmem:[%s117 + $0x310] sm:$0xff]
        %v237 = vld [vmem:[%s117 + $0x318] sm:$0xff]
        %v238 = vld [vmem:[%s117 + $0x320] sm:$0xff]
        %v239 = vld [vmem:[%s117 + $0x328] sm:$0xff]
        %v240 = vld [vmem:[%s117 + $0x330] sm:$0xff]
        %v241 = vld [vmem:[%s117 + $0x338] sm:$0xff]
        %v242 = vld [vmem:[%s117 + $0x340] sm:$0xff]
        %v243 = vld [vmem:[%s117 + $0x348] sm:$0xff]
        %v244 = vld [vmem:[%s117 + $0x350] sm:$0xff]
        %v245 = vld [vmem:[%s117 + $0x358] sm:$0xff]
        %v246 = vld [vmem:[%s117 + $0x360] sm:$0xff]
        %v247 = vld [vmem:[%s117 + $0x368] sm:$0xff]
        %v248 = vld [vmem:[%s117 + $0x370] sm:$0xff]
        %v249 = vld [vmem:[%s117 + $0x378] sm:$0xff]
        %v250 = vld [vmem:[%s117 + $0x380] sm:$0xff]
        %v251 = vld [vmem:[%s117 + $0x388] sm:$0xff]
        %v252 = vld [vmem:[%s117 + $0x390] sm:$0xff]
        %v253 = vld [vmem:[%s117 + $0x398] sm:$0xff]
        %v254 = vld [vmem:[%s117 + $0x3a0] sm:$0xff]
        %v255 = vld [vmem:[%s117 + $0x3a8] sm:$0xff]
        %v256 = vld [vmem:[%s117 + $0x3b0] sm:$0xff]
        %v257 = vld [vmem:[%s117 + $0x3b8] sm:$0xff]
        %v258 = vld [vmem:[%s117 + $0x3c0] sm:$0xff]
        %v259 = vld [vmem:[%s117 + $0x3c8] sm:$0xff]
        %v260 = vld [vmem:[%s117 + $0x3d0] sm:$0xff]
        %v261 = vld [vmem:[%s117 + $0x3d8] sm:$0xff]
        %v262 = vld [vmem:[%s117 + $0x3e0] sm:$0xff]
        %v263 = vld [vmem:[%s117 + $0x3e8] sm:$0xff]
        %v264 = vld [vmem:[%s117 + $0x3f0] sm:$0xff]
        %v265 = vld [vmem:[%s117 + $0x3f8] sm:$0xff]
        %v266 = vadd.f32 %v138, 3.0
        %v267 = vadd.f32 %v139, 3.0
        %v268 = vadd.f32 %v140, 3.0
        %v269 = vadd.f32 %v141, 3.0
        %v270 = vadd.f32 %v142, 3.0
        %v271 = vadd.f32 %v143, 3.0
        %v272 = vadd.f32 %v144, 3.0
        %v273 = vadd.f32 %v145, 3.0
        %v274 = vadd.f32 %v146, 3.0
        %v275 = vadd.f32 %v147, 3.0
        %v276 = vadd.f32 %v148, 3.0
        %v277 = vadd.f32 %v149, 3.0
        %v278 = vadd.f32 %v150, 3.0
        %v279 = vadd.f32 %v151, 3.0
        %v280 = vadd.f32 %v152, 3.0
        %v281 = vadd.f32 %v153, 3.0
        %v282 = vadd.f32 %v154, 3.0
        %v283 = vadd.f32 %v155, 3.0
        %v284 = vadd.f32 %v156, 3.0
        %v285 = vadd.f32 %v157, 3.0
        %v286 = vadd.f32 %v158, 3.0
        %v287 = vadd.f32 %v159, 3.0
        %v288 = vadd.f32 %v160, 3.0
        %v289 = vadd.f32 %v161, 3.0
        %v290 = vadd.f32 %v162, 3.0
        %v291 = vadd.f32 %v163, 3.0
        %v292 = vadd.f32 %v164, 3.0
        %v293 = vadd.f32 %v165, 3.0
        %v294 = vadd.f32 %v166, 3.0
        %v295 = vadd.f32 %v167, 3.0
        %v296 = vadd.f32 %v168, 3.0
        %v297 = vadd.f32 %v169, 3.0
        %v298 = vadd.f32 %v170, 3.0
        %v299 = vadd.f32 %v171, 3.0
        %v300 = vadd.f32 %v172, 3.0
        %v301 = vadd.f32 %v173, 3.0
        %v302 = vadd.f32 %v174, 3.0
        %v303 = vadd.f32 %v175, 3.0
        %v304 = vadd.f32 %v176, 3.0
        %v305 = vadd.f32 %v177, 3.0
        %v306 = vadd.f32 %v178, 3.0
        %v307 = vadd.f32 %v179, 3.0
        %v308 = vadd.f32 %v180, 3.0
        %v309 = vadd.f32 %v181, 3.0
        %v310 = vadd.f32 %v182, 3.0
        %v311 = vadd.f32 %v183, 3.0
        %v312 = vadd.f32 %v184, 3.0
        %v313 = vadd.f32 %v185, 3.0
        %v314 = vadd.f32 %v186, 3.0
        %v315 = vadd.f32 %v187, 3.0
        %v316 = vadd.f32 %v188, 3.0
        %v317 = vadd.f32 %v189, 3.0
        %v318 = vadd.f32 %v190, 3.0
        %v319 = vadd.f32 %v191, 3.0
        %v320 = vadd.f32 %v192, 3.0
        %v321 = vadd.f32 %v193, 3.0
        %v322 = vadd.f32 %v194, 3.0
        %v323 = vadd.f32 %v195, 3.0
        %v324 = vadd.f32 %v196, 3.0
        %v325 = vadd.f32 %v197, 3.0
        %v326 = vadd.f32 %v198, 3.0
        %v327 = vadd.f32 %v199, 3.0
        %v328 = vadd.f32 %v200, 3.0
        %v329 = vadd.f32 %v201, 3.0
        %v330 = vadd.f32 %v202, 3.0
        %v331 = vadd.f32 %v203, 3.0
        %v332 = vadd.f32 %v204, 3.0
        %v333 = vadd.f32 %v205, 3.0
        %v334 = vadd.f32 %v206, 3.0
        %v335 = vadd.f32 %v207, 3.0
        %v336 = vadd.f32 %v208, 3.0
        %v337 = vadd.f32 %v209, 3.0
        %v338 = vadd.f32 %v210, 3.0
        %v339 = vadd.f32 %v211, 3.0
        %v340 = vadd.f32 %v212, 3.0
        %v341 = vadd.f32 %v213, 3.0
        %v342 = vadd.f32 %v214, 3.0
        %v343 = vadd.f32 %v215, 3.0
        %v344 = vadd.f32 %v216, 3.0
        %v345 = vadd.f32 %v217, 3.0
        %v346 = vadd.f32 %v218, 3.0
        %v347 = vadd.f32 %v219, 3.0
        %v348 = vadd.f32 %v220, 3.0
        %v349 = vadd.f32 %v221, 3.0
        %v350 = vadd.f32 %v222, 3.0
        %v351 = vadd.f32 %v223, 3.0
        %v352 = vadd.f32 %v224, 3.0
        %v353 = vadd.f32 %v225, 3.0
        %v354 = vadd.f32 %v226, 3.0
        %v355 = vadd.f32 %v227, 3.0
        %v356 = vadd.f32 %v228, 3.0
        %v357 = vadd.f32 %v229, 3.0
        %v358 = vadd.f32 %v230, 3.0
        %v359 = vadd.f32 %v231, 3.0
        %v360 = vadd.f32 %v232, 3.0
        %v361 = vadd.f32 %v233, 3.0
        %v362 = vadd.f32 %v234, 3.0
        %v363 = vadd.f32 %v235, 3.0
        %v364 = vadd.f32 %v236, 3.0
        %v365 = vadd.f32 %v237, 3.0
        %v366 = vadd.f32 %v238, 3.0
        %v367 = vadd.f32 %v239, 3.0
        %v368 = vadd.f32 %v240, 3.0
        %v369 = vadd.f32 %v241, 3.0
        %v370 = vadd.f32 %v242, 3.0
        %v371 = vadd.f32 %v243, 3.0
        %v372 = vadd.f32 %v244, 3.0
        %v373 = vadd.f32 %v245, 3.0
        %v374 = vadd.f32 %v246, 3.0
        %v375 = vadd.f32 %v247, 3.0
        %v376 = vadd.f32 %v248, 3.0
        %v377 = vadd.f32 %v249, 3.0
        %v378 = vadd.f32 %v250, 3.0
        %v379 = vadd.f32 %v251, 3.0
        %v380 = vadd.f32 %v252, 3.0
        %v381 = vadd.f32 %v253, 3.0
        %v382 = vadd.f32 %v254, 3.0
        %v383 = vadd.f32 %v255, 3.0
        %v384 = vadd.f32 %v256, 3.0
        %v385 = vadd.f32 %v257, 3.0
        %v386 = vadd.f32 %v258, 3.0
        %v387 = vadd.f32 %v259, 3.0
        %v388 = vadd.f32 %v260, 3.0
        %v389 = vadd.f32 %v261, 3.0
        %v390 = vadd.f32 %v262, 3.0
        %v391 = vadd.f32 %v263, 3.0
        %v392 = vadd.f32 %v264, 3.0
        %v393 = vadd.f32 %v265, 3.0
        %v394 = vmul.f32 %v266, 0.16666667
        %v395 = vmul.f32 %v267, 0.16666667
        %v396 = vmul.f32 %v268, 0.16666667
        %v397 = vmul.f32 %v269, 0.16666667
        %v398 = vmul.f32 %v270, 0.16666667
        %v399 = vmul.f32 %v271, 0.16666667
        %v400 = vmul.f32 %v272, 0.16666667
        %v401 = vmul.f32 %v273, 0.16666667
        %v402 = vmul.f32 %v274, 0.16666667
        %v403 = vmul.f32 %v275, 0.16666667
        %v404 = vmul.f32 %v276, 0.16666667
        %v405 = vmul.f32 %v277, 0.16666667
        %v406 = vmul.f32 %v278, 0.16666667
        %v407 = vmul.f32 %v279, 0.16666667
        %v408 = vmul.f32 %v280, 0.16666667
        %v409 = vmul.f32 %v281, 0.16666667
        %v410 = vmul.f32 %v282, 0.16666667
        %v411 = vmul.f32 %v283, 0.16666667
        %v412 = vmul.f32 %v284, 0.16666667
        %v413 = vmul.f32 %v285, 0.16666667
        %v414 = vmul.f32 %v286, 0.16666667
        %v415 = vmul.f32 %v287, 0.16666667
        %v416 = vmul.f32 %v288, 0.16666667
        %v417 = vmul.f32 %v289, 0.16666667
        %v418 = vmul.f32 %v290, 0.16666667
        %v419 = vmul.f32 %v291, 0.16666667
        %v420 = vmul.f32 %v292, 0.16666667
        %v421 = vmul.f32 %v293, 0.16666667
        %v422 = vmul.f32 %v294, 0.16666667
        %v423 = vmul.f32 %v295, 0.16666667
        %v424 = vmul.f32 %v296, 0.16666667
        %v425 = vmul.f32 %v297, 0.16666667
        %v426 = vmul.f32 %v298, 0.16666667
        %v427 = vmul.f32 %v299, 0.16666667
        %v428 = vmul.f32 %v300, 0.16666667
        %v429 = vmul.f32 %v301, 0.16666667
        %v430 = vmul.f32 %v302, 0.16666667
        %v431 = vmul.f32 %v303, 0.16666667
        %v432 = vmul.f32 %v304, 0.16666667
        %v433 = vmul.f32 %v305, 0.16666667
        %v434 = vmul.f32 %v306, 0.16666667
        %v435 = vmul.f32 %v307, 0.16666667
        %v436 = vmul.f32 %v308, 0.16666667
        %v437 = vmul.f32 %v309, 0.16666667
        %v438 = vmul.f32 %v310, 0.16666667
        %v439 = vmul.f32 %v311, 0.16666667
        %v440 = vmul.f32 %v312, 0.16666667
        %v441 = vmul.f32 %v313, 0.16666667
        %v442 = vmul.f32 %v314, 0.16666667
        %v443 = vmul.f32 %v315, 0.16666667
        %v444 = vmul.f32 %v316, 0.16666667
        %v445 = vmul.f32 %v317, 0.16666667
        %v446 = vmul.f32 %v318, 0.16666667
        %v447 = vmul.f32 %v319, 0.16666667
        %v448 = vmul.f32 %v320, 0.16666667
        %v449 = vmul.f32 %v321, 0.16666667
        %v450 = vmul.f32 %v322, 0.16666667
        %v451 = vmul.f32 %v323, 0.16666667
        %v452 = vmul.f32 %v324, 0.16666667
        %v453 = vmul.f32 %v325, 0.16666667
        %v454 = vmul.f32 %v326, 0.16666667
        %v455 = vmul.f32 %v327, 0.16666667
        %v456 = vmul.f32 %v328, 0.16666667
        %v457 = vmul.f32 %v329, 0.16666667
        %v458 = vmul.f32 %v330, 0.16666667
        %v459 = vmul.f32 %v331, 0.16666667
        %v460 = vmul.f32 %v332, 0.16666667
        %v461 = vmul.f32 %v333, 0.16666667
        %v462 = vmul.f32 %v334, 0.16666667
        %v463 = vmul.f32 %v335, 0.16666667
        %v464 = vmul.f32 %v336, 0.16666667
        %v465 = vmul.f32 %v337, 0.16666667
        %v466 = vmul.f32 %v338, 0.16666667
        %v467 = vmul.f32 %v339, 0.16666667
        %v468 = vmul.f32 %v340, 0.16666667
        %v469 = vmul.f32 %v341, 0.16666667
        %v470 = vmul.f32 %v342, 0.16666667
        %v471 = vmul.f32 %v343, 0.16666667
        %v472 = vmul.f32 %v344, 0.16666667
        %v473 = vmul.f32 %v345, 0.16666667
        %v474 = vmul.f32 %v346, 0.16666667
        %v475 = vmul.f32 %v347, 0.16666667
        %v476 = vmul.f32 %v348, 0.16666667
        %v477 = vmul.f32 %v349, 0.16666667
        %v478 = vmul.f32 %v350, 0.16666667
        %v479 = vmul.f32 %v351, 0.16666667
        %v480 = vmul.f32 %v352, 0.16666667
        %v481 = vmul.f32 %v353, 0.16666667
        %v482 = vmul.f32 %v354, 0.16666667
        %v483 = vmul.f32 %v355, 0.16666667
        %v484 = vmul.f32 %v356, 0.16666667
        %v485 = vmul.f32 %v357, 0.16666667
        %v486 = vmul.f32 %v358, 0.16666667
        %v487 = vmul.f32 %v359, 0.16666667
        %v488 = vmul.f32 %v360, 0.16666667
        %v489 = vmul.f32 %v361, 0.16666667
        %v490 = vmul.f32 %v362, 0.16666667
        %v491 = vmul.f32 %v363, 0.16666667
        %v492 = vmul.f32 %v364, 0.16666667
        %v493 = vmul.f32 %v365, 0.16666667
        %v494 = vmul.f32 %v366, 0.16666667
        %v495 = vmul.f32 %v367, 0.16666667
        %v496 = vmul.f32 %v368, 0.16666667
        %v497 = vmul.f32 %v369, 0.16666667
        %v498 = vmul.f32 %v370, 0.16666667
        %v499 = vmul.f32 %v371, 0.16666667
        %v500 = vmul.f32 %v372, 0.16666667
        %v501 = vmul.f32 %v373, 0.16666667
        %v502 = vmul.f32 %v374, 0.16666667
        %v503 = vmul.f32 %v375, 0.16666667
        %v504 = vmul.f32 %v376, 0.16666667
        %v505 = vmul.f32 %v377, 0.16666667
        %v506 = vmul.f32 %v378, 0.16666667
        %v507 = vmul.f32 %v379, 0.16666667
        %v508 = vmul.f32 %v380, 0.16666667
        %v509 = vmul.f32 %v381, 0.16666667
        %v510 = vmul.f32 %v382, 0.16666667
        %v511 = vmul.f32 %v383, 0.16666667
        %v512 = vmul.f32 %v384, 0.16666667
        %v513 = vmul.f32 %v385, 0.16666667
        %v514 = vmul.f32 %v386, 0.16666667
        %v515 = vmul.f32 %v387, 0.16666667
        %v516 = vmul.f32 %v388, 0.16666667
        %v517 = vmul.f32 %v389, 0.16666667
        %v518 = vmul.f32 %v390, 0.16666667
        %v519 = vmul.f32 %v391, 0.16666667
        %v520 = vmul.f32 %v392, 0.16666667
        %v521 = vmul.f32 %v393, 0.16666667
        %v522 = vmax.f32 %v394, 0.0
        %v523 = vmax.f32 %v395, 0.0
        %v524 = vmax.f32 %v396, 0.0
        %v525 = vmax.f32 %v397, 0.0
        %v526 = vmax.f32 %v398, 0.0
        %v527 = vmax.f32 %v399, 0.0
        %v528 = vmax.f32 %v400, 0.0
        %v529 = vmax.f32 %v401, 0.0
        %v530 = vmax.f32 %v402, 0.0
        %v531 = vmax.f32 %v403, 0.0
        %v532 = vmax.f32 %v404, 0.0
        %v533 = vmax.f32 %v405, 0.0
        %v534 = vmax.f32 %v406, 0.0
        %v535 = vmax.f32 %v407, 0.0
        %v536 = vmax.f32 %v408, 0.0
        %v537 = vmax.f32 %v409, 0.0
        %v538 = vmax.f32 %v410, 0.0
        %v539 = vmax.f32 %v411, 0.0
        %v540 = vmax.f32 %v412, 0.0
        %v541 = vmax.f32 %v413, 0.0
        %v542 = vmax.f32 %v414, 0.0
        %v543 = vmax.f32 %v415, 0.0
        %v544 = vmax.f32 %v416, 0.0
        %v545 = vmax.f32 %v417, 0.0
        %v546 = vmax.f32 %v418, 0.0
        %v547 = vmax.f32 %v419, 0.0
        %v548 = vmax.f32 %v420, 0.0
        %v549 = vmax.f32 %v421, 0.0
        %v550 = vmax.f32 %v422, 0.0
        %v551 = vmax.f32 %v423, 0.0
        %v552 = vmax.f32 %v424, 0.0
        %v553 = vmax.f32 %v425, 0.0
        %v554 = vmax.f32 %v426, 0.0
        %v555 = vmax.f32 %v427, 0.0
        %v556 = vmax.f32 %v428, 0.0
        %v557 = vmax.f32 %v429, 0.0
        %v558 = vmax.f32 %v430, 0.0
        %v559 = vmax.f32 %v431, 0.0
        %v560 = vmax.f32 %v432, 0.0
        %v561 = vmax.f32 %v433, 0.0
        %v562 = vmax.f32 %v434, 0.0
        %v563 = vmax.f32 %v435, 0.0
        %v564 = vmax.f32 %v436, 0.0
        %v565 = vmax.f32 %v437, 0.0
        %v566 = vmax.f32 %v438, 0.0
        %v567 = vmax.f32 %v439, 0.0
        %v568 = vmax.f32 %v440, 0.0
        %v569 = vmax.f32 %v441, 0.0
        %v570 = vmax.f32 %v442, 0.0
        %v571 = vmax.f32 %v443, 0.0
        %v572 = vmax.f32 %v444, 0.0
        %v573 = vmax.f32 %v445, 0.0
        %v574 = vmax.f32 %v446, 0.0
        %v575 = vmax.f32 %v447, 0.0
        %v576 = vmax.f32 %v448, 0.0
        %v577 = vmax.f32 %v449, 0.0
        %v578 = vmax.f32 %v450, 0.0
        %v579 = vmax.f32 %v451, 0.0
        %v580 = vmax.f32 %v452, 0.0
        %v581 = vmax.f32 %v453, 0.0
        %v582 = vmax.f32 %v454, 0.0
        %v583 = vmax.f32 %v455, 0.0
        %v584 = vmax.f32 %v456, 0.0
        %v585 = vmax.f32 %v457, 0.0
        %v586 = vmax.f32 %v458, 0.0
        %v587 = vmax.f32 %v459, 0.0
        %v588 = vmax.f32 %v460, 0.0
        %v589 = vmax.f32 %v461, 0.0
        %v590 = vmax.f32 %v462, 0.0
        %v591 = vmax.f32 %v463, 0.0
        %v592 = vmax.f32 %v464, 0.0
        %v593 = vmax.f32 %v465, 0.0
        %v594 = vmax.f32 %v466, 0.0
        %v595 = vmax.f32 %v467, 0.0
        %v596 = vmax.f32 %v468, 0.0
        %v597 = vmax.f32 %v469, 0.0
        %v598 = vmax.f32 %v470, 0.0
        %v599 = vmax.f32 %v471, 0.0
        %v600 = vmax.f32 %v472, 0.0
        %v601 = vmax.f32 %v473, 0.0
        %v602 = vmax.f32 %v474, 0.0
        %v603 = vmax.f32 %v475, 0.0
        %v604 = vmax.f32 %v476, 0.0
        %v605 = vmax.f32 %v477, 0.0
        %v606 = vmax.f32 %v478, 0.0
        %v607 = vmax.f32 %v479, 0.0
        %v608 = vmax.f32 %v480, 0.0
        %v609 = vmax.f32 %v481, 0.0
        %v610 = vmax.f32 %v482, 0.0
        %v611 = vmax.f32 %v483, 0.0
        %v612 = vmax.f32 %v484, 0.0
        %v613 = vmax.f32 %v485, 0.0
        %v614 = vmax.f32 %v486, 0.0
        %v615 = vmax.f32 %v487, 0.0
        %v616 = vmax.f32 %v488, 0.0
        %v617 = vmax.f32 %v489, 0.0
        %v618 = vmax.f32 %v490, 0.0
        %v619 = vmax.f32 %v491, 0.0
        %v620 = vmax.f32 %v492, 0.0
        %v621 = vmax.f32 %v493, 0.0
        %v622 = vmax.f32 %v494, 0.0
        %v623 = vmax.f32 %v495, 0.0
        %v624 = vmax.f32 %v496, 0.0
        %v625 = vmax.f32 %v497, 0.0
        %v626 = vmax.f32 %v498, 0.0
        %v627 = vmax.f32 %v499, 0.0
        %v628 = vmax.f32 %v500, 0.0
        %v629 = vmax.f32 %v501, 0.0
        %v630 = vmax.f32 %v502, 0.0
        %v631 = vmax.f32 %v503, 0.0
        %v632 = vmax.f32 %v504, 0.0
        %v633 = vmax.f32 %v505, 0.0
        %v634 = vmax.f32 %v506, 0.0
        %v635 = vmax.f32 %v507, 0.0
        %v636 = vmax.f32 %v508, 0.0
        %v637 = vmax.f32 %v509, 0.0
        %v638 = vmax.f32 %v510, 0.0
        %v639 = vmax.f32 %v511, 0.0
        %v640 = vmax.f32 %v512, 0.0
        %v641 = vmax.f32 %v513, 0.0
        %v642 = vmax.f32 %v514, 0.0
        %v643 = vmax.f32 %v515, 0.0
        %v644 = vmax.f32 %v516, 0.0
        %v645 = vmax.f32 %v517, 0.0
        %v646 = vmax.f32 %v518, 0.0
        %v647 = vmax.f32 %v519, 0.0
        %v648 = vmax.f32 %v520, 0.0
        %v649 = vmax.f32 %v521, 0.0
        %v650 = vmin.f32 %v522, 1.0
        %v651 = vmin.f32 %v523, 1.0
        %v652 = vmin.f32 %v524, 1.0
        %v653 = vmin.f32 %v525, 1.0
        %v654 = vmin.f32 %v526, 1.0
        %v655 = vmin.f32 %v527, 1.0
        %v656 = vmin.f32 %v528, 1.0
        %v657 = vmin.f32 %v529, 1.0
        %v658 = vmin.f32 %v530, 1.0
        %v659 = vmin.f32 %v531, 1.0
        %v660 = vmin.f32 %v532, 1.0
        %v661 = vmin.f32 %v533, 1.0
        %v662 = vmin.f32 %v534, 1.0
        %v663 = vmin.f32 %v535, 1.0
        %v664 = vmin.f32 %v536, 1.0
        %v665 = vmin.f32 %v537, 1.0
        %v666 = vmin.f32 %v538, 1.0
        %v667 = vmin.f32 %v539, 1.0
        %v668 = vmin.f32 %v540, 1.0
        %v669 = vmin.f32 %v541, 1.0
        %v670 = vmin.f32 %v542, 1.0
        %v671 = vmin.f32 %v543, 1.0
        %v672 = vmin.f32 %v544, 1.0
        %v673 = vmin.f32 %v545, 1.0
        %v674 = vmin.f32 %v546, 1.0
        %v675 = vmin.f32 %v547, 1.0
        %v676 = vmin.f32 %v548, 1.0
        %v677 = vmin.f32 %v549, 1.0
        %v678 = vmin.f32 %v550, 1.0
        %v679 = vmin.f32 %v551, 1.0
        %v680 = vmin.f32 %v552, 1.0
        %v681 = vmin.f32 %v553, 1.0
        %v682 = vmin.f32 %v554, 1.0
        %v683 = vmin.f32 %v555, 1.0
        %v684 = vmin.f32 %v556, 1.0
        %v685 = vmin.f32 %v557, 1.0
        %v686 = vmin.f32 %v558, 1.0
        %v687 = vmin.f32 %v559, 1.0
        %v688 = vmin.f32 %v560, 1.0
        %v689 = vmin.f32 %v561, 1.0
        %v690 = vmin.f32 %v562, 1.0
        %v691 = vmin.f32 %v563, 1.0
        %v692 = vmin.f32 %v564, 1.0
        %v693 = vmin.f32 %v565, 1.0
        %v694 = vmin.f32 %v566, 1.0
        %v695 = vmin.f32 %v567, 1.0
        %v696 = vmin.f32 %v568, 1.0
        %v697 = vmin.f32 %v569, 1.0
        %v698 = vmin.f32 %v570, 1.0
        %v699 = vmin.f32 %v571, 1.0
        %v700 = vmin.f32 %v572, 1.0
        %v701 = vmin.f32 %v573, 1.0
        %v702 = vmin.f32 %v574, 1.0
        %v703 = vmin.f32 %v575, 1.0
        %v704 = vmin.f32 %v576, 1.0
        %v705 = vmin.f32 %v577, 1.0
        %v706 = vmin.f32 %v578, 1.0
        %v707 = vmin.f32 %v579, 1.0
        %v708 = vmin.f32 %v580, 1.0
        %v709 = vmin.f32 %v581, 1.0
        %v710 = vmin.f32 %v582, 1.0
        %v711 = vmin.f32 %v583, 1.0
        %v712 = vmin.f32 %v584, 1.0
        %v713 = vmin.f32 %v585, 1.0
        %v714 = vmin.f32 %v586, 1.0
        %v715 = vmin.f32 %v587, 1.0
        %v716 = vmin.f32 %v588, 1.0
        %v717 = vmin.f32 %v589, 1.0
        %v718 = vmin.f32 %v590, 1.0
        %v719 = vmin.f32 %v591, 1.0
        %v720 = vmin.f32 %v592, 1.0
        %v721 = vmin.f32 %v593, 1.0
        %v722 = vmin.f32 %v594, 1.0
        %v723 = vmin.f32 %v595, 1.0
        %v724 = vmin.f32 %v596, 1.0
        %v725 = vmin.f32 %v597, 1.0
        %v726 = vmin.f32 %v598, 1.0
        %v727 = vmin.f32 %v599, 1.0
        %v728 = vmin.f32 %v600, 1.0
        %v729 = vmin.f32 %v601, 1.0
        %v730 = vmin.f32 %v602, 1.0
        %v731 = vmin.f32 %v603, 1.0
        %v732 = vmin.f32 %v604, 1.0
        %v733 = vmin.f32 %v605, 1.0
        %v734 = vmin.f32 %v606, 1.0
        %v735 = vmin.f32 %v607, 1.0
        %v736 = vmin.f32 %v608, 1.0
        %v737 = vmin.f32 %v609, 1.0
        %v738 = vmin.f32 %v610, 1.0
        %v739 = vmin.f32 %v611, 1.0
        %v740 = vmin.f32 %v612, 1.0
        %v741 = vmin.f32 %v613, 1.0
        %v742 = vmin.f32 %v614, 1.0
        %v743 = vmin.f32 %v615, 1.0
        %v744 = vmin.f32 %v616, 1.0
        %v745 = vmin.f32 %v617, 1.0
        %v746 = vmin.f32 %v618, 1.0
        %v747 = vmin.f32 %v619, 1.0
        %v748 = vmin.f32 %v620, 1.0
        %v749 = vmin.f32 %v621, 1.0
        %v750 = vmin.f32 %v622, 1.0
        %v751 = vmin.f32 %v623, 1.0
        %v752 = vmin.f32 %v624, 1.0
        %v753 = vmin.f32 %v625, 1.0
        %v754 = vmin.f32 %v626, 1.0
        %v755 = vmin.f32 %v627, 1.0
        %v756 = vmin.f32 %v628, 1.0
        %v757 = vmin.f32 %v629, 1.0
        %v758 = vmin.f32 %v630, 1.0
        %v759 = vmin.f32 %v631, 1.0
        %v760 = vmin.f32 %v632, 1.0
        %v761 = vmin.f32 %v633, 1.0
        %v762 = vmin.f32 %v634, 1.0
        %v763 = vmin.f32 %v635, 1.0
        %v764 = vmin.f32 %v636, 1.0
        %v765 = vmin.f32 %v637, 1.0
        %v766 = vmin.f32 %v638, 1.0
        %v767 = vmin.f32 %v639, 1.0
        %v768 = vmin.f32 %v640, 1.0
        %v769 = vmin.f32 %v641, 1.0
        %v770 = vmin.f32 %v642, 1.0
        %v771 = vmin.f32 %v643, 1.0
        %v772 = vmin.f32 %v644, 1.0
        %v773 = vmin.f32 %v645, 1.0
        %v774 = vmin.f32 %v646, 1.0
        %v775 = vmin.f32 %v647, 1.0
        %v776 = vmin.f32 %v648, 1.0
        %v777 = vmin.f32 %v649, 1.0
        %778 = vst [vmem:[%s135] sm:$0xff] %v650
        %779 = vst [vmem:[%s135 + $0x8] sm:$0xff] %v651
        %780 = vst [vmem:[%s135 + $0x10] sm:$0xff] %v652
        %781 = vst [vmem:[%s135 + $0x18] sm:$0xff] %v653
        %782 = vst [vmem:[%s135 + $0x20] sm:$0xff] %v654
        %783 = vst [vmem:[%s135 + $0x28] sm:$0xff] %v655
        %784 = vst [vmem:[%s135 + $0x30] sm:$0xff] %v656
        %785 = vst [vmem:[%s135 + $0x38] sm:$0xff] %v657
        %786 = vst [vmem:[%s135 + $0x40] sm:$0xff] %v658
        %787 = vst [vmem:[%s135 + $0x48] sm:$0xff] %v659
        %788 = vst [vmem:[%s135 + $0x50] sm:$0xff] %v660
        %789 = vst [vmem:[%s135 + $0x58] sm:$0xff] %v661
        %790 = vst [vmem:[%s135 + $0x60] sm:$0xff] %v662
        %791 = vst [vmem:[%s135 + $0x68] sm:$0xff] %v663
        %792 = vst [vmem:[%s135 + $0x70] sm:$0xff] %v664
        %793 = vst [vmem:[%s135 + $0x78] sm:$0xff] %v665
        %794 = vst [vmem:[%s135 + $0x80] sm:$0xff] %v666
        %795 = vst [vmem:[%s135 + $0x88] sm:$0xff] %v667
        %796 = vst [vmem:[%s135 + $0x90] sm:$0xff] %v668
        %797 = vst [vmem:[%s135 + $0x98] sm:$0xff] %v669
        %798 = vst [vmem:[%s135 + $0xa0] sm:$0xff] %v670
        %799 = vst [vmem:[%s135 + $0xa8] sm:$0xff] %v671
        %800 = vst [vmem:[%s135 + $0xb0] sm:$0xff] %v672
        %801 = vst [vmem:[%s135 + $0xb8] sm:$0xff] %v673
        %802 = vst [vmem:[%s135 + $0xc0] sm:$0xff] %v674
        %803 = vst [vmem:[%s135 + $0xc8] sm:$0xff] %v675
        %804 = vst [vmem:[%s135 + $0xd0] sm:$0xff] %v676
        %805 = vst [vmem:[%s135 + $0xd8] sm:$0xff] %v677
        %806 = vst [vmem:[%s135 + $0xe0] sm:$0xff] %v678
        %807 = vst [vmem:[%s135 + $0xe8] sm:$0xff] %v679
        %808 = vst [vmem:[%s135 + $0xf0] sm:$0xff] %v680
        %809 = vst [vmem:[%s135 + $0xf8] sm:$0xff] %v681
        %810 = vst [vmem:[%s135 + $0x100] sm:$0xff] %v682
        %811 = vst [vmem:[%s135 + $0x108] sm:$0xff] %v683
        %812 = vst [vmem:[%s135 + $0x110] sm:$0xff] %v684
        %813 = vst [vmem:[%s135 + $0x118] sm:$0xff] %v685
        %814 = vst [vmem:[%s135 + $0x120] sm:$0xff] %v686
        %815 = vst [vmem:[%s135 + $0x128] sm:$0xff] %v687
        %816 = vst [vmem:[%s135 + $0x130] sm:$0xff] %v688
        %817 = vst [vmem:[%s135 + $0x138] sm:$0xff] %v689
        %818 = vst [vmem:[%s135 + $0x140] sm:$0xff] %v690
        %819 = vst [vmem:[%s135 + $0x148] sm:$0xff] %v691
        %820 = vst [vmem:[%s135 + $0x150] sm:$0xff] %v692
        %821 = vst [vmem:[%s135 + $0x158] sm:$0xff] %v693
        %822 = vst [vmem:[%s135 + $0x160] sm:$0xff] %v694
        %823 = vst [vmem:[%s135 + $0x168] sm:$0xff] %v695
        %824 = vst [vmem:[%s135 + $0x170] sm:$0xff] %v696
        %825 = vst [vmem:[%s135 + $0x178] sm:$0xff] %v697
        %826 = vst [vmem:[%s135 + $0x180] sm:$0xff] %v698
        %827 = vst [vmem:[%s135 + $0x188] sm:$0xff] %v699
        %828 = vst [vmem:[%s135 + $0x190] sm:$0xff] %v700
        %829 = vst [vmem:[%s135 + $0x198] sm:$0xff] %v701
        %830 = vst [vmem:[%s135 + $0x1a0] sm:$0xff] %v702
        %831 = vst [vmem:[%s135 + $0x1a8] sm:$0xff] %v703
        %832 = vst [vmem:[%s135 + $0x1b0] sm:$0xff] %v704
        %833 = vst [vmem:[%s135 + $0x1b8] sm:$0xff] %v705
        %834 = vst [vmem:[%s135 + $0x1c0] sm:$0xff] %v706
        %835 = vst [vmem:[%s135 + $0x1c8] sm:$0xff] %v707
        %836 = vst [vmem:[%s135 + $0x1d0] sm:$0xff] %v708
        %837 = vst [vmem:[%s135 + $0x1d8] sm:$0xff] %v709
        %838 = vst [vmem:[%s135 + $0x1e0] sm:$0xff] %v710
        %839 = vst [vmem:[%s135 + $0x1e8] sm:$0xff] %v711
        %840 = vst [vmem:[%s135 + $0x1f0] sm:$0xff] %v712
        %841 = vst [vmem:[%s135 + $0x1f8] sm:$0xff] %v713
        %842 = vst [vmem:[%s135 + $0x200] sm:$0xff] %v714
        %843 = vst [vmem:[%s135 + $0x208] sm:$0xff] %v715
        %844 = vst [vmem:[%s135 + $0x210] sm:$0xff] %v716
        %845 = vst [vmem:[%s135 + $0x218] sm:$0xff] %v717
        %846 = vst [vmem:[%s135 + $0x220] sm:$0xff] %v718
        %847 = vst [vmem:[%s135 + $0x228] sm:$0xff] %v719
        %848 = vst [vmem:[%s135 + $0x230] sm:$0xff] %v720
        %849 = vst [vmem:[%s135 + $0x238] sm:$0xff] %v721
        %850 = vst [vmem:[%s135 + $0x240] sm:$0xff] %v722
        %851 = vst [vmem:[%s135 + $0x248] sm:$0xff] %v723
        %852 = vst [vmem:[%s135 + $0x250] sm:$0xff] %v724
        %853 = vst [vmem:[%s135 + $0x258] sm:$0xff] %v725
        %854 = vst [vmem:[%s135 + $0x260] sm:$0xff] %v726
        %855 = vst [vmem:[%s135 + $0x268] sm:$0xff] %v727
        %856 = vst [vmem:[%s135 + $0x270] sm:$0xff] %v728
        %857 = vst [vmem:[%s135 + $0x278] sm:$0xff] %v729
        %858 = vst [vmem:[%s135 + $0x280] sm:$0xff] %v730
        %859 = vst [vmem:[%s135 + $0x288] sm:$0xff] %v731
        %860 = vst [vmem:[%s135 + $0x290] sm:$0xff] %v732
        %861 = vst [vmem:[%s135 + $0x298] sm:$0xff] %v733
        %862 = vst [vmem:[%s135 + $0x2a0] sm:$0xff] %v734
        %863 = vst [vmem:[%s135 + $0x2a8] sm:$0xff] %v735
        %864 = vst [vmem:[%s135 + $0x2b0] sm:$0xff] %v736
        %865 = vst [vmem:[%s135 + $0x2b8] sm:$0xff] %v737
        %866 = vst [vmem:[%s135 + $0x2c0] sm:$0xff] %v738
        %867 = vst [vmem:[%s135 + $0x2c8] sm:$0xff] %v739
        %868 = vst [vmem:[%s135 + $0x2d0] sm:$0xff] %v740
        %869 = vst [vmem:[%s135 + $0x2d8] sm:$0xff] %v741
        %870 = vst [vmem:[%s135 + $0x2e0] sm:$0xff] %v742
        %871 = vst [vmem:[%s135 + $0x2e8] sm:$0xff] %v743
        %872 = vst [vmem:[%s135 + $0x2f0] sm:$0xff] %v744
        %873 = vst [vmem:[%s135 + $0x2f8] sm:$0xff] %v745
        %874 = vst [vmem:[%s135 + $0x300] sm:$0xff] %v746
        %875 = vst [vmem:[%s135 + $0x308] sm:$0xff] %v747
        %876 = vst [vmem:[%s135 + $0x310] sm:$0xff] %v748
        %877 = vst [vmem:[%s135 + $0x318] sm:$0xff] %v749
        %878 = vst [vmem:[%s135 + $0x320] sm:$0xff] %v750
        %879 = vst [vmem:[%s135 + $0x328] sm:$0xff] %v751
        %880 = vst [vmem:[%s135 + $0x330] sm:$0xff] %v752
        %881 = vst [vmem:[%s135 + $0x338] sm:$0xff] %v753
        %882 = vst [vmem:[%s135 + $0x340] sm:$0xff] %v754
        %883 = vst [vmem:[%s135 + $0x348] sm:$0xff] %v755
        %884 = vst [vmem:[%s135 + $0x350] sm:$0xff] %v756
        %885 = vst [vmem:[%s135 + $0x358] sm:$0xff] %v757
        %886 = vst [vmem:[%s135 + $0x360] sm:$0xff] %v758
        %887 = vst [vmem:[%s135 + $0x368] sm:$0xff] %v759
        %888 = vst [vmem:[%s135 + $0x370] sm:$0xff] %v760
        %889 = vst [vmem:[%s135 + $0x378] sm:$0xff] %v761
        %890 = vst [vmem:[%s135 + $0x380] sm:$0xff] %v762
        %891 = vst [vmem:[%s135 + $0x388] sm:$0xff] %v763
        %892 = vst [vmem:[%s135 + $0x390] sm:$0xff] %v764
        %893 = vst [vmem:[%s135 + $0x398] sm:$0xff] %v765
        %894 = vst [vmem:[%s135 + $0x3a0] sm:$0xff] %v766
        %895 = vst [vmem:[%s135 + $0x3a8] sm:$0xff] %v767
        %896 = vst [vmem:[%s135 + $0x3b0] sm:$0xff] %v768
        %897 = vst [vmem:[%s135 + $0x3b8] sm:$0xff] %v769
        %898 = vst [vmem:[%s135 + $0x3c0] sm:$0xff] %v770
        %899 = vst [vmem:[%s135 + $0x3c8] sm:$0xff] %v771
        %900 = vst [vmem:[%s135 + $0x3d0] sm:$0xff] %v772
        %901 = vst [vmem:[%s135 + $0x3d8] sm:$0xff] %v773
        %902 = vst [vmem:[%s135 + $0x3e0] sm:$0xff] %v774
        %903 = vst [vmem:[%s135 + $0x3e8] sm:$0xff] %v775
        %904 = vst [vmem:[%s135 + $0x3f0] sm:$0xff] %v776
        %905 = vst [vmem:[%s135 + $0x3f8] sm:$0xff] %v777
        %s906 = sand.u32 %s52, 1
        %s907 = scalar_lea.sflag [#allocation4], %s906
        %s908 = sand.u32 %s52, 1
        %s909 = smul.addr %s908, 1024
        %s910 = scalar_lea.vmem [#allocation5], %s909
        // Predicated region
        $region29: #{tpu_custom_call.1} parent=23 // pred_check
          %p911 = pneg %p62
        $region30: #{tpu_custom_call.1} parent=23 // pred_check_branch
          %913 = sbr.rel (%p911) target = $region32
        $region31: #{tpu_custom_call.1} parent=23 // pred_region
          %s914 = smul.u32 2, %s18
          %s916 = ssub.s32 16384, 16384
          %917 = vsyncadd %s907, %s916
          %s918 = smul.addr %s914, 64
          %s919 = smul.addr %s918, 128
          %s920 = scalar_lea.hbm %s1, %s919
          %s921 = sshll.u32 %s910, 4
          %s922 = int_to_ptr.vmem [resolvable:$true] %s921
          %927 = dma.vmem_to_hbm [thread:$0]  %s922, 16384, %s920, %s907, 8192, 8192, 512
        $region32: #{tpu_custom_call.1} parent=23 // pred_fallthru
          _
      $region24: #{tpu_custom_call.1} parent=5 // pred_fallthru
        _
      %p928 = scmp.le.s32.totalorder 2, %s13
      // Predicated region
      $region33: #{tpu_custom_call.1} parent=5 // pred_check
        %p929 = pneg %p928
      $region34: #{tpu_custom_call.1} parent=5 // pred_check_branch
        %931 = sbr.rel (%p929) target = $region36
      $region35: #{tpu_custom_call.1} parent=5 // pred_region
        %s932 = ssub.s32 %s13, 2
        // Predicated region
        $region37: #{tpu_custom_call.1} parent=35 // pred_check
          %p933 = pneg %p68
        $region38: #{tpu_custom_call.1} parent=35 // pred_check_branch
          %935 = sbr.rel (%p933) target = $region40
        $region39: #{tpu_custom_call.1} parent=35 // pred_region
          %s936 = sand.u32 %s53, 1
          %s937 = scalar_lea.sflag [#allocation4], %s936
          %s938 = sand.u32 %s53, 1
          %s939 = smul.addr %s938, 1024
          %s940 = scalar_lea.vmem [#allocation5], %s939
          %941 = dma.done %s937, 16384
        $region40: #{tpu_custom_call.1} parent=35 // pred_fallthru
          _
      $region36: #{tpu_custom_call.1} parent=5 // pred_fallthru
        _
    $region6: #{tpu_custom_call.1} parent=1 // loop_footer
      %s17 = sadd.s32 1, %s13
    $region7: #{tpu_custom_call.1} parent=1 // loop_footer_branch
      %12 = sbr.rel target = $region3
    $region8: #{tpu_custom_call.1} parent=1 // loop_exit
      _
    %942 = vsyncpa [#allocation3], 1
    %s943 = scalar_lea.sflag [#allocation3], 1
    %944 = vsyncpa %s943, 1
    %945 = vsyncpa [#allocation4], 1
    %s946 = scalar_lea.sflag [#allocation4], 1
    %947 = vsyncpa %s946, 1

</llo_original>
